<compile_context>
chip_gen: v6e
topology: v6e:2x2x1
jax: 0.10.0
libtpu: 0.0.40
codegen_flags: <defaults>
</compile_context>

<pallas_src>
import jax
import jax.numpy as jnp
from jax.experimental import pallas as pl
from jax.experimental.pallas import tpu as pltpu

BN_EPS = 1e-5


def mlp_kernel(xT_ref, w1_ref, b1_ref, gamma_ref, beta_ref, w2_ref, b2_ref, o_ref):
    # xT: (F, B), w1: (H, F), b1/gamma/beta: (H, 1), w2: (O, H), b2: SMEM (1, 1)
    # o:  (O, B)
    xT = xT_ref[...]
    w1 = w1_ref[...]

    # fc1 in transposed layout: (H, F) @ (F, B) -> (H, B); lane axis = batch.
    h = jnp.dot(w1, xT, preferred_element_type=jnp.float32) + b1_ref[...]

    # Fused BatchNorm1d (train-mode batch stats, biased variance) + affine + ReLU.
    # Single pass over h: sum and sum-of-squares along the lane (batch) axis,
    # then one fused scale/shift + max.
    inv_b = 1.0 / h.shape[1]
    mean = jnp.sum(h, axis=1, keepdims=True) * inv_b            # (H, 1)
    mean_sq = jnp.sum(h * h, axis=1, keepdims=True) * inv_b     # (H, 1)
    var = mean_sq - mean * mean
    scale = gamma_ref[...] * jax.lax.rsqrt(var + BN_EPS)        # (H, 1)
    shift = beta_ref[...] - mean * scale                        # (H, 1)
    h = jnp.maximum(h * scale + shift, 0.0)                     # BN + ReLU fused

    # fc2: (O, H) @ (H, B) keeps the batch (lane) axis dense on the MXU output.
    o_ref[...] = (
        jnp.dot(w2_ref[...], h, preferred_element_type=jnp.float32) + b2_ref[0, 0]
    )


def mlp_forward(x, w1, b1, gamma, beta, w2, b2):
    """x: (B, F) float32.  w1: (H, F), b1/gamma/beta: (H,), w2: (O, H), b2: (O,)."""
    B, F = x.shape
    H = w1.shape[0]
    O = w2.shape[0]

    # Layout plumbing only: present batch as the lane axis to the kernel.
    xT = jnp.transpose(x)              # (F, B)
    b1_c = b1.reshape(H, 1)
    gamma_c = gamma.reshape(H, 1)
    beta_c = beta.reshape(H, 1)
    b2_s = b2.reshape(1, 1)            # scalar bias -> SMEM

    vmem = pl.BlockSpec(memory_space=pltpu.MemorySpace.VMEM)
    smem = pl.BlockSpec(memory_space=pltpu.MemorySpace.SMEM)

    outT = pl.pallas_call(
        mlp_kernel,
        out_shape=jax.ShapeDtypeStruct((O, B), jnp.float32),
        in_specs=[vmem, vmem, vmem, vmem, vmem, vmem, smem],
        out_specs=vmem,
    )(xT, w1, b1_c, gamma_c, beta_c, w2, b2_s)

    return jnp.transpose(outT)         # (B, O)


def init_params(key, fr_attribute_size, prediction_context_size):
    input_channels = fr_attribute_size + prediction_context_size
    hidden = 10
    out_channels = 1
    k1, k2, k3, k4 = jax.random.split(key, 4)

    # Mimic nn.Linear's uniform(-1/sqrt(fan_in), 1/sqrt(fan_in)) init.
    bound1 = 1.0 / jnp.sqrt(jnp.float32(input_channels))
    w1 = jax.random.uniform(k1, (hidden, input_channels), jnp.float32, -bound1, bound1)
    b1 = jax.random.uniform(k2, (hidden,), jnp.float32, -bound1, bound1)

    # BatchNorm1d affine params: gamma=1, beta=0 (PyTorch default init).
    gamma = jnp.ones((hidden,), jnp.float32)
    beta = jnp.zeros((hidden,), jnp.float32)

    bound2 = 1.0 / jnp.sqrt(jnp.float32(hidden))
    w2 = jax.random.uniform(k3, (out_channels, hidden), jnp.float32, -bound2, bound2)
    b2 = jax.random.uniform(k4, (out_channels,), jnp.float32, -bound2, bound2)

    return w1, b1, gamma, beta, w2, b2


if __name__ == "__main__":
    FR_attribute_size = 4
    prediction_context_size = 4
    batch = 8

    key = jax.random.PRNGKey(0)
    kx, kp = jax.random.split(key)

    x = jax.random.normal(
        kx, (batch, FR_attribute_size + prediction_context_size), dtype=jnp.float32
    )
    params = init_params(kp, FR_attribute_size, prediction_context_size)

    out = mlp_forward(x, *params)
    jax.block_until_ready(out)

    assert out.shape == (batch, 1), out.shape
    print("KERNEL_OK")
</pallas_src>

<mosaic_0001>
module attributes {stable_mosaic.version = 11 : i64} {
  func.func @mlp_kernel(%arg0: memref<8x8xf32, #tpu.memory_space<vmem>>, %arg1: memref<10x8xf32, #tpu.memory_space<vmem>>, %arg2: memref<10x1xf32, #tpu.memory_space<vmem>>, %arg3: memref<10x1xf32, #tpu.memory_space<vmem>>, %arg4: memref<10x1xf32, #tpu.memory_space<vmem>>, %arg5: memref<1x10xf32, #tpu.memory_space<vmem>>, %arg6: memref<1x1xf32, #tpu.memory_space<smem>>, %arg7: memref<1x8xf32, #tpu.memory_space<vmem>>) attributes {dimension_semantics = [], scalar_prefetch = 0 : i64, scratch_operands = 0 : i64, tpu.core_type = #tpu.core_type<tc>} {
    %c0 = arith.constant 0 : index
    %c0_0 = arith.constant 0 : index
    %0 = vector.load %arg0[%c0, %c0_0] : memref<8x8xf32, #tpu.memory_space<vmem>>, vector<8x8xf32>
    %c0_1 = arith.constant 0 : index
    %c0_2 = arith.constant 0 : index
    %1 = vector.load %arg1[%c0_1, %c0_2] : memref<10x8xf32, #tpu.memory_space<vmem>>, vector<10x8xf32>
    %cst = arith.constant dense<0.000000e+00> : vector<10x8xf32>
    %2 = tpu.matmul %1, %0, %cst {dimension_numbers = #tpu.dot_dimension_numbers<[1], [0], [0], [1], [0, 0, 1, 1], [], []>} : vector<10x8xf32>, vector<8x8xf32>, vector<10x8xf32> -> vector<10x8xf32>
    %c0_3 = arith.constant 0 : index
    %c0_4 = arith.constant 0 : index
    %3 = vector.load %arg2[%c0_3, %c0_4] : memref<10x1xf32, #tpu.memory_space<vmem>>, vector<10x1xf32>
    %4 = vector.broadcast %3 : vector<10x1xf32> to vector<10x8xf32>
    %5 = arith.addf %2, %4 : vector<10x8xf32>
    %cst_5 = arith.constant dense<0.000000e+00> : vector<10xf32>
    %6 = vector.multi_reduction <add>, %5, %cst_5 [1] : vector<10x8xf32> to vector<10xf32>
    %7 = vector.shape_cast %6 : vector<10xf32> to vector<10x1xf32>
    %cst_6 = arith.constant 1.250000e-01 : f32
    %8 = vector.broadcast %cst_6 : f32 to vector<10x1xf32>
    %9 = arith.mulf %7, %8 : vector<10x1xf32>
    %10 = arith.mulf %5, %5 : vector<10x8xf32>
    %cst_7 = arith.constant dense<0.000000e+00> : vector<10xf32>
    %11 = vector.multi_reduction <add>, %10, %cst_7 [1] : vector<10x8xf32> to vector<10xf32>
    %12 = vector.shape_cast %11 : vector<10xf32> to vector<10x1xf32>
    %cst_8 = arith.constant 1.250000e-01 : f32
    %13 = vector.broadcast %cst_8 : f32 to vector<10x1xf32>
    %14 = arith.mulf %12, %13 : vector<10x1xf32>
    %15 = arith.mulf %9, %9 : vector<10x1xf32>
    %16 = arith.subf %14, %15 : vector<10x1xf32>
    %c0_9 = arith.constant 0 : index
    %c0_10 = arith.constant 0 : index
    %17 = vector.load %arg3[%c0_9, %c0_10] : memref<10x1xf32, #tpu.memory_space<vmem>>, vector<10x1xf32>
    %cst_11 = arith.constant 9.99999974E-6 : f32
    %18 = vector.broadcast %cst_11 : f32 to vector<10x1xf32>
    %19 = arith.addf %16, %18 : vector<10x1xf32>
    %20 = math.rsqrt %19 : vector<10x1xf32>
    %21 = arith.mulf %17, %20 : vector<10x1xf32>
    %c0_12 = arith.constant 0 : index
    %c0_13 = arith.constant 0 : index
    %22 = vector.load %arg4[%c0_12, %c0_13] : memref<10x1xf32, #tpu.memory_space<vmem>>, vector<10x1xf32>
    %23 = arith.mulf %9, %21 : vector<10x1xf32>
    %24 = arith.subf %22, %23 : vector<10x1xf32>
    %25 = vector.broadcast %21 : vector<10x1xf32> to vector<10x8xf32>
    %26 = arith.mulf %5, %25 : vector<10x8xf32>
    %27 = vector.broadcast %24 : vector<10x1xf32> to vector<10x8xf32>
    %28 = arith.addf %26, %27 : vector<10x8xf32>
    %cst_14 = arith.constant 0.000000e+00 : f32
    %29 = vector.broadcast %cst_14 : f32 to vector<10x8xf32>
    %30 = arith.maximumf %28, %29 : vector<10x8xf32>
    %c0_15 = arith.constant 0 : index
    %c0_16 = arith.constant 0 : index
    %31 = vector.load %arg5[%c0_15, %c0_16] : memref<1x10xf32, #tpu.memory_space<vmem>>, vector<1x10xf32>
    %cst_17 = arith.constant dense<0.000000e+00> : vector<1x8xf32>
    %32 = tpu.matmul %31, %30, %cst_17 {dimension_numbers = #tpu.dot_dimension_numbers<[1], [0], [0], [1], [0, 0, 1, 1], [], []>} : vector<1x10xf32>, vector<10x8xf32>, vector<1x8xf32> -> vector<1x8xf32>
    %c0_18 = arith.constant 0 : index
    %c0_19 = arith.constant 0 : index
    %33 = memref.load %arg6[%c0_18, %c0_19] : memref<1x1xf32, #tpu.memory_space<smem>>
    %34 = vector.broadcast %33 : f32 to vector<1x8xf32>
    %35 = arith.addf %32, %34 : vector<1x8xf32>
    %c0_20 = arith.constant 0 : index
    %c0_21 = arith.constant 0 : index
    %36 = vector.load %arg7[%c0_20, %c0_21] : memref<1x8xf32, #tpu.memory_space<vmem>>, vector<1x8xf32>
    tpu.vector_store %arg7[%c0_20, %c0_21], %35 {strides = array<i32>} : memref<1x8xf32, #tpu.memory_space<vmem>>, vector<1x8xf32>,
    return
  }
}

</mosaic_0001>

<llo_original>
// kernel: tpu_custom_call.1
$region0: #{tpu_custom_call.1}
  #allocation0 [shape = 'u32[]', space=smem, size = 0x4, offset = 0x4, fixed_abs, tag = 'smem constant byte address 0x4 - core index']
  #allocation1 [shape = 'u32[144,128]{1,0:T(1,128)}', space=vmem, size = 0x12000, scoped, tag = 'internal scratch']
  #allocation2 [shape = 'f32[1,1]{1,0:T(1,128)S(6)}', space=smem, size = 0x200, scoped, tag = 'scoped memory for tpu_custom_call.1']
  %s0 = inlined_call_operand.vmem [shape: f32[8,8], index: 0, kind: input, shape index: {}]
  %s1 = inlined_call_operand.vmem [shape: f32[10,8], index: 1, kind: input, shape index: {}]
  %s2 = inlined_call_operand.vmem [shape: f32[10,1], index: 2, kind: input, shape index: {}]
  %s3 = inlined_call_operand.vmem [shape: f32[10,1], index: 3, kind: input, shape index: {}]
  %s4 = inlined_call_operand.vmem [shape: f32[10,1], index: 4, kind: input, shape index: {}]
  %s5 = inlined_call_operand.vmem [shape: f32[1,10], index: 5, kind: input, shape index: {}]
  %s6 = inlined_call_operand.<no memory space> [shape: f32[1,1], index: 6, kind: input, shape index: {}]
  %s7 = inlined_call_operand.hbm [shape: f32[1,8], index: 7, kind: output, shape index: {}]
  %s8 = sld [smem:[#allocation0]]
  $region38: #{tpu_custom_call.1} parent=0
    _
  %s10 = ssub.s32 1, %s8
  %s11 = scalar_select 0, %s10, %s8
  %12 = sst [smem:[#allocation2]] %s6
  $region1: #{tpu_custom_call.1} parent=0
    #allocation3 [shape = 'u8[512]{0}', space=vmem, size = 0x400, scoped, tag = 'output window, operand 0, single buffered']
    #allocation4 [shape = 's32[1]{0}', space=sflag, size = 0x4, scoped, tag = 'scoped memory for tpu_custom_call.1']
    %13 = vsyncpa [#allocation4], 0
    // Predicated region
    $region2: #{tpu_custom_call.1} parent=1 // pred_check
      _
    $region3: #{tpu_custom_call.1} parent=1 // pred_check_branch
      %15 = sbr.rel (0) target = $region5
    $region4: #{tpu_custom_call.1} parent=1 // pred_region
      _
    $region5: #{tpu_custom_call.1} parent=1 // pred_fallthru
      _
    // Predicated region
    $region6: #{tpu_custom_call.1} parent=1 // pred_check
      _
    $region7: #{tpu_custom_call.1} parent=1 // pred_check_branch
      %17 = sbr.rel (0) target = $region9
    $region8: #{tpu_custom_call.1} parent=1 // pred_region
      _
    $region9: #{tpu_custom_call.1} parent=1 // pred_fallthru
      _
    // Predicated region
    $region10: #{tpu_custom_call.1} parent=1 // pred_check
      _
    $region11: #{tpu_custom_call.1} parent=1 // pred_check_branch
      %19 = sbr.rel (0) target = $region13
    $region12: #{tpu_custom_call.1} parent=1 // pred_region
      _
    $region13: #{tpu_custom_call.1} parent=1 // pred_fallthru
      _
    // Predicated region
    $region14: #{tpu_custom_call.1} parent=1 // pred_check
      _
    $region15: #{tpu_custom_call.1} parent=1 // pred_check_branch
      %21 = sbr.rel (0) target = $region17
    $region16: #{tpu_custom_call.1} parent=1 // pred_region
      _
    $region17: #{tpu_custom_call.1} parent=1 // pred_fallthru
      _
    // Predicated region
    $region18: #{tpu_custom_call.1} parent=1 // pred_check
      _
    $region19: #{tpu_custom_call.1} parent=1 // pred_check_branch
      %23 = sbr.rel (0) target = $region21
    $region20: #{tpu_custom_call.1} parent=1 // pred_region
      _
    $region21: #{tpu_custom_call.1} parent=1 // pred_fallthru
      _
    // Predicated region
    $region22: #{tpu_custom_call.1} parent=1 // pred_check
      _
    $region23: #{tpu_custom_call.1} parent=1 // pred_check_branch
      %25 = sbr.rel (0) target = $region25
    $region24: #{tpu_custom_call.1} parent=1 // pred_region
      _
    $region25: #{tpu_custom_call.1} parent=1 // pred_fallthru
      _
    // Predicated region
    $region26: #{tpu_custom_call.1} parent=1 // pred_check
      _
    $region27: #{tpu_custom_call.1} parent=1 // pred_check_branch
      %27 = sbr.rel (0) target = $region29
    $region28: #{tpu_custom_call.1} parent=1 // pred_region
      _
    $region29: #{tpu_custom_call.1} parent=1 // pred_fallthru
      _
    %v28 = vld [vmem:[%s0] sm:$0xff]
    %v29 = vld [vmem:[%s1] sm:$0xff]
    %v30 = vld [vmem:[%s1 + $0x8] sm:$0x3]
    %v31 = vld [vmem:[%s2] sm:$0xff]
    %v32 = vld [vmem:[%s2 + $0x8] sm:$0x3]
    %34 = vset.pattern.permute.xlu0 0
    %35 = vperm.xlu0 %34, %v31
    %v36 = vpop.permute.xlu0 %35
    %39 = vset.pattern.permute.xlu0 0
    %40 = vperm.xlu0 %39, %v32
    %v41 = vpop.permute.xlu0 %40
    %vm43 = vcmask 64512
    %v45 = vsel %vm43, %v29, 0
    %v48 = vsel %vm43, %v30, 0
    %50 = vmatprep.subr.mxu0 0.0
    %51 = vmatpush1.msra.mxu0 0.0
    %52 = vmatprep.subr.mxu0 0.0
    %53 = vmatpush1.msra.mxu0 0.0
    %54 = vmatprep.subr.mxu0 0.0
    %55 = vmatpush1.msra.mxu0 0.0
    %56 = vmatprep.subr.mxu0 0.0
    %57 = vmatpush1.msra.mxu0 0.0
    %58 = vmatprep.subr.mxu0 0.0
    %59 = vmatpush1.msra.mxu0 0.0
    %60 = vmatprep.subr.mxu0 0.0
    %61 = vmatpush1.msra.mxu0 0.0
    %62 = vmatprep.subr.mxu0 0.0
    %63 = vmatpush1.msra.mxu0 0.0
    %64 = vmatprep.subr.mxu0 0.0
    %65 = vmatpush1.msra.mxu0 0.0
    %66 = vmatprep.subr.mxu0 0.0
    %67 = vmatpush1.msra.mxu0 0.0
    %68 = vmatprep.subr.mxu0 0.0
    %69 = vmatpush1.msra.mxu0 0.0
    %70 = vmatprep.subr.mxu0 0.0
    %71 = vmatpush1.msra.mxu0 0.0
    %72 = vmatprep.subr.mxu0 0.0
    %73 = vmatpush1.msra.mxu0 0.0
    %74 = vmatprep.subr.mxu0 0.0
    %75 = vmatpush1.msra.mxu0 0.0
    %76 = vmatprep.subr.mxu0 0.0
    %77 = vmatpush1.msra.mxu0 0.0
    %78 = vmatprep.subr.mxu0 0.0
    %79 = vmatpush1.msra.mxu0 0.0
    %80 = vmatprep.subr.mxu0 0.0
    %81 = vmatpush1.msra.mxu0 %v28
    %82 = vmatprep.subr.mxu0 0.0
    %83 = vmatpush2.msra.mxu0 0.0
    %84 = vmatprep.subr.mxu0 0.0
    %85 = vmatpush2.msra.mxu0 0.0
    %86 = vmatprep.subr.mxu0 0.0
    %87 = vmatpush2.msra.mxu0 0.0
    %88 = vmatprep.subr.mxu0 0.0
    %89 = vmatpush2.msra.mxu0 0.0
    %90 = vmatprep.subr.mxu0 0.0
    %91 = vmatpush2.msra.mxu0 0.0
    %92 = vmatprep.subr.mxu0 0.0
    %93 = vmatpush2.msra.mxu0 0.0
    %94 = vmatprep.subr.mxu0 0.0
    %95 = vmatpush2.msra.mxu0 0.0
    %96 = vmatprep.subr.mxu0 0.0
    %97 = vmatpush2.msra.mxu0 0.0
    %98 = vmatprep.subr.mxu0 0.0
    %99 = vmatpush2.msra.mxu0 0.0
    %100 = vmatprep.subr.mxu0 0.0
    %101 = vmatpush2.msra.mxu0 0.0
    %102 = vmatprep.subr.mxu0 0.0
    %103 = vmatpush2.msra.mxu0 0.0
    %104 = vmatprep.subr.mxu0 0.0
    %105 = vmatpush2.msra.mxu0 0.0
    %106 = vmatprep.subr.mxu0 0.0
    %107 = vmatpush2.msra.mxu0 0.0
    %108 = vmatprep.subr.mxu0 0.0
    %109 = vmatpush2.msra.mxu0 0.0
    %110 = vmatprep.subr.mxu0 0.0
    %111 = vmatpush2.msra.mxu0 0.0
    %112 = vmatprep.subr.mxu0 0.0
    %113 = vmatpush2.msra.mxu0 0.0
    %114 = vmatprep.mubr.f32.mxu0 0.0
    %115 = vmatmul.mubr.f32.gmra.mxu0 %v45
    %v116 = vpop.f32.mrf.mxu0
    %v117 = vadd.f32 %v36, %v116
    %v118 = vpop.f32.mrf.mxu0
    %119 = vmatprep.mubr.f32.mxu0 0.0
    %120 = vmatmul.mubr.f32.gmra.mxu0 %v48
    %v121 = vpop.f32.mrf.mxu0
    %v122 = vadd.f32 %v41, %v121
    %v123 = vpop.f32.mrf.mxu0
    %124 = vdwg.mxu0
    %v125 = vsel %vm43, %v117, 0.0
    %126 = vadd.xlane.f32.xlu0 %v125
    %v127 = vpop.xlane.xlu0 %126
    %vm128 = vcmask 58368
    %v129 = vsel %vm128, %v122, 0.0
    %130 = vadd.xlane.f32.xlu0 %v129
    %v131 = vpop.xlane.xlu0 %130
    %v132 = vmul.f32 %v127, 0.125
    %v133 = vmul.f32 %v131, 0.125
    %v134 = vmul.f32 %v117, %v117
    %v135 = vmul.f32 %v122, %v122
    %v136 = vsel %vm43, %v134, 0.0
    %137 = vadd.xlane.f32.xlu0 %v136
    %v138 = vpop.xlane.xlu0 %137
    %v139 = vsel %vm128, %v135, 0.0
    %140 = vadd.xlane.f32.xlu0 %v139
    %v141 = vpop.xlane.xlu0 %140
    %v142 = vmul.f32 %v138, 0.125
    %v143 = vmul.f32 %v141, 0.125
    %v144 = vmul.f32 %v132, %v132
    %v145 = vmul.f32 %v133, %v133
    %v146 = vsub.f32 %v142, %v144
    %v147 = vsub.f32 %v143, %v145
    %v148 = vld [vmem:[%s3] sm:$0xff]
    %v149 = vld [vmem:[%s3 + $0x8] sm:$0x3]
    %v150 = vadd.f32 %v146, 1e-05
    %v151 = vadd.f32 %v147, 1e-05
    %v152 = vrsqrt.pop %v150
    %v153 = vrsqrt.pop %v151
    %v154 = vmul.f32 %v148, %v152
    %v155 = vmul.f32 %v149, %v153
    %v156 = vld [vmem:[%s4] sm:$0xff]
    %v157 = vld [vmem:[%s4 + $0x8] sm:$0x3]
    %v158 = vmul.f32 %v132, %v154
    %v159 = vmul.f32 %v133, %v155
    %v160 = vsub.f32 %v156, %v158
    %v161 = vsub.f32 %v157, %v159
    %163 = vset.pattern.permute.xlu0 0
    %164 = vperm.xlu0 %163, %v154
    %v165 = vpop.permute.xlu0 %164
    %168 = vset.pattern.permute.xlu0 0
    %169 = vperm.xlu0 %168, %v155
    %v170 = vpop.permute.xlu0 %169
    %v172 = vmul.f32 %v117, %v165
    %v173 = vmul.f32 %v122, %v170
    %175 = vset.pattern.permute.xlu0 0
    %176 = vperm.xlu0 %175, %v160
    %v177 = vpop.permute.xlu0 %176
    %180 = vset.pattern.permute.xlu0 0
    %181 = vperm.xlu0 %180, %v161
    %v182 = vpop.permute.xlu0 %181
    %v184 = vadd.f32 %v172, %v177
    %v185 = vadd.f32 %v173, %v182
    %v186 = vmax.f32 %v184, 0.0
    %v187 = vmax.f32 %v185, 0.0
    %v188 = vld [vmem:[%s5] sm:$0x1]
    %s189 = sld [smem:[#allocation2]]
    %v190 = vstv %s189
    %vm191 = vcmask 80896
    %v193 = vsel %vm191, %v188, 0
    %vm195 = vcmask 1041408
    %v197 = vsel %vm195, %v187, 0
    %199 = vmatprep.subr.mxu0 0.0
    %200 = vmatpush1.msra.mxu0 0.0
    %201 = vmatprep.subr.mxu0 0.0
    %202 = vmatpush1.msra.mxu0 0.0
    %203 = vmatprep.subr.mxu0 0.0
    %204 = vmatpush1.msra.mxu0 0.0
    %205 = vmatprep.subr.mxu0 0.0
    %206 = vmatpush1.msra.mxu0 0.0
    %207 = vmatprep.subr.mxu0 0.0
    %208 = vmatpush1.msra.mxu0 0.0
    %209 = vmatprep.subr.mxu0 0.0
    %210 = vmatpush1.msra.mxu0 0.0
    %211 = vmatprep.subr.mxu0 0.0
    %212 = vmatpush1.msra.mxu0 0.0
    %213 = vmatprep.subr.mxu0 0.0
    %214 = vmatpush1.msra.mxu0 0.0
    %215 = vmatprep.subr.mxu0 0.0
    %216 = vmatpush1.msra.mxu0 0.0
    %217 = vmatprep.subr.mxu0 0.0
    %218 = vmatpush1.msra.mxu0 0.0
    %219 = vmatprep.subr.mxu0 0.0
    %220 = vmatpush1.msra.mxu0 0.0
    %221 = vmatprep.subr.mxu0 0.0
    %222 = vmatpush1.msra.mxu0 0.0
    %223 = vmatprep.subr.mxu0 0.0
    %224 = vmatpush1.msra.mxu0 0.0
    %225 = vmatprep.subr.mxu0 0.0
    %226 = vmatpush1.msra.mxu0 0.0
    %227 = vmatprep.subr.mxu0 0.0
    %228 = vmatpush1.msra.mxu0 %v197
    %229 = vmatprep.subr.mxu0 0.0
    %230 = vmatpush1.msra.mxu0 %v186
    %231 = vmatprep.subr.mxu0 0.0
    %232 = vmatpush2.msra.mxu0 0.0
    %233 = vmatprep.subr.mxu0 0.0
    %234 = vmatpush2.msra.mxu0 0.0
    %235 = vmatprep.subr.mxu0 0.0
    %236 = vmatpush2.msra.mxu0 0.0
    %237 = vmatprep.subr.mxu0 0.0
    %238 = vmatpush2.msra.mxu0 0.0
    %239 = vmatprep.subr.mxu0 0.0
    %240 = vmatpush2.msra.mxu0 0.0
    %241 = vmatprep.subr.mxu0 0.0
    %242 = vmatpush2.msra.mxu0 0.0
    %243 = vmatprep.subr.mxu0 0.0
    %244 = vmatpush2.msra.mxu0 0.0
    %245 = vmatprep.subr.mxu0 0.0
    %246 = vmatpush2.msra.mxu0 0.0
    %247 = vmatprep.subr.mxu0 0.0
    %248 = vmatpush2.msra.mxu0 0.0
    %249 = vmatprep.subr.mxu0 0.0
    %250 = vmatpush2.msra.mxu0 0.0
    %251 = vmatprep.subr.mxu0 0.0
    %252 = vmatpush2.msra.mxu0 0.0
    %253 = vmatprep.subr.mxu0 0.0
    %254 = vmatpush2.msra.mxu0 0.0
    %255 = vmatprep.subr.mxu0 0.0
    %256 = vmatpush2.msra.mxu0 0.0
    %257 = vmatprep.subr.mxu0 0.0
    %258 = vmatpush2.msra.mxu0 0.0
    %259 = vmatprep.subr.mxu0 0.0
    %260 = vmatpush2.msra.mxu0 0.0
    %261 = vmatprep.subr.mxu0 0.0
    %262 = vmatpush2.msra.mxu0 0.0
    %263 = vmatprep.mubr.f32.mxu0 0.0
    %264 = vmatmul.mubr.f32.gmra.mxu0 %v193
    %v265 = vpop.f32.mrf.mxu0
    %v266 = vadd.f32 %v190, %v265
    %v267 = vpop.f32.mrf.mxu0
    %268 = vdwg.mxu0
    %vm269 = vcmask 57344
    %270 = vst.msk [vmem:[#allocation3] sm:$0x1] %vm269, %v266
    // Predicated region
    $region30: #{tpu_custom_call.1} parent=1 // pred_check
      _
    $region31: #{tpu_custom_call.1} parent=1 // pred_check_branch
      %272 = sbr.rel (0) target = $region33
    $region32: #{tpu_custom_call.1} parent=1 // pred_region
      %s274 = ssub.s32 16, 16
      %275 = vsyncadd [#allocation4], %s274
      %s277 = sshll.u32 [#allocation3], 4
      %s278 = int_to_ptr.vmem [resolvable:$true] %s277
      %280 = dma.vmem_to_hbm [thread:$0]  %s278, 16, %s7, [#allocation4]
    $region33: #{tpu_custom_call.1} parent=1 // pred_fallthru
      _
    // Predicated region
    $region34: #{tpu_custom_call.1} parent=1 // pred_check
      _
    $region35: #{tpu_custom_call.1} parent=1 // pred_check_branch
      %282 = sbr.rel (0) target = $region37
    $region36: #{tpu_custom_call.1} parent=1 // pred_region
      %283 = dma.done [#allocation4], 16
    $region37: #{tpu_custom_call.1} parent=1 // pred_fallthru
      _
    %284 = vsyncpa [#allocation4], 1

</llo_original>
